<compile_context>
chip_gen: v7x
topology: tpu7x:2x2x1
jax: 0.10.0
libtpu: 0.0.40
codegen_flags: <defaults>
</compile_context>

<pallas_src>
import jax
import jax.numpy as jnp
from jax.experimental import pallas as pl
from jax.experimental.pallas import tpu as pltpu

T_TEMP = 3.0
INV_T = 1.0 / T_TEMP
EPS = 1e-7


def _make_kernel(n_rows, batch_tile, n_classes, need_row_mask):
    def kernel(pred_ref, label_ref, out_ref):
        pred = pred_ref[...].astype(jnp.float32) * INV_T
        label = label_ref[...].astype(jnp.float32) * INV_T

        # log_softmax(pred / T, axis=-1)   (numerically stable)
        pmax = jnp.max(pred, axis=-1, keepdims=True)
        psh = pred - pmax
        lse = jnp.log(jnp.sum(jnp.exp(psh), axis=-1, keepdims=True))
        log_predict = psh - lse

        # softmax(label / T, axis=-1) + eps
        lmax = jnp.max(label, axis=-1, keepdims=True)
        lexp = jnp.exp(label - lmax)
        target = lexp * pl.reciprocal(jnp.sum(lexp, axis=-1, keepdims=True))
        target = target + EPS

        # elementwise KL contribution for this batch tile
        contrib = target * (jnp.log(target) - log_predict)

        if need_row_mask:
            row = (pl.program_id(0) * batch_tile
                   + jax.lax.broadcasted_iota(jnp.int32, (batch_tile, n_classes), 0))
            contrib = jnp.where(row < n_rows, contrib, 0.0)

        # Sublane-only reduce; cross-lane reduce is deferred to the wrapper.
        out_ref[...] = jnp.sum(contrib, axis=0, keepdims=True)

    return kernel


def kl_loss(pred, label, *, batch_tile=None):
    """Pallas implementation of KLLoss.forward(pred, label) -> scalar."""
    assert pred.shape == label.shape and pred.ndim == 2
    assert pred.dtype == label.dtype
    n, c = pred.shape
    itemsize = jnp.dtype(pred.dtype).itemsize
    row_mult = {4: 8, 2: 16, 1: 32}.get(itemsize, 8)

    if batch_tile is None:
        # 2 inputs x 2 pipeline buffers x tile bytes <= ~16 MiB, comfortably
        # inside the 32 MiB scoped VMEM limit requested below on every gen
        # (v5e/v6e: 128 MiB physical, v7x: 64 MiB physical).
        budget = 16 * 1024 * 1024
        max_rows = max(row_mult,
                       (budget // (4 * c * itemsize)) // row_mult * row_mult)
        batch_tile = min(max_rows, pl.cdiv(n, row_mult) * row_mult)
    batch_tile = max(row_mult, (batch_tile // row_mult) * row_mult)

    num_tiles = pl.cdiv(n, batch_tile)
    n_pad = num_tiles * batch_tile
    if n_pad != n:
        pad = ((0, n_pad - n), (0, 0))
        pred = jnp.pad(pred, pad)
        label = jnp.pad(label, pad)

    kernel = _make_kernel(n, batch_tile, c, need_row_mask=(n_pad != n))

    partials = pl.pallas_call(
        kernel,
        out_shape=jax.ShapeDtypeStruct((num_tiles, c), jnp.float32),
        grid_spec=pltpu.PrefetchScalarGridSpec(
            num_scalar_prefetch=0,
            grid=(num_tiles,),
            in_specs=[
                pl.BlockSpec((batch_tile, c), lambda i: (i, 0)),
                pl.BlockSpec((batch_tile, c), lambda i: (i, 0)),
            ],
            out_specs=pl.BlockSpec((1, c), lambda i: (i, 0)),
        ),
        compiler_params=pltpu.CompilerParams(
            dimension_semantics=("parallel",),
            vmem_limit_bytes=32 * 1024 * 1024,
        ),
    )(pred, label)

    # Final cross-lane reduce + T*T scaling and division by batch size.
    return (T_TEMP * T_TEMP) * jnp.sum(partials) / n


def _reference(pred, label):
    """Pure-JAX reference mirroring the PyTorch forward."""
    predict = jax.nn.log_softmax(pred / T_TEMP, axis=1)
    target = jax.nn.softmax(label / T_TEMP, axis=1) + EPS
    return T_TEMP * T_TEMP * jnp.sum(target * (jnp.log(target) - predict)) / pred.shape[0]


if __name__ == "__main__":
    key = jax.random.PRNGKey(0)

    def check(n, c, batch_tile=None):
        k1, k2 = jax.random.split(jax.random.fold_in(key, n * 1000 + c))
        pred = jax.random.normal(k1, (n, c), dtype=jnp.float32)
        label = jax.random.normal(k2, (n, c), dtype=jnp.float32)
        out = jax.block_until_ready(kl_loss(pred, label, batch_tile=batch_tile))
        ref = _reference(pred, label)
        assert jnp.allclose(out, ref, rtol=1e-5, atol=1e-5), (n, c, out, ref)

    check(8, 32)                 # exact-fit single tile
    check(10, 32)                # non-multiple-of-8 batch: padded + masked rows
    check(24, 32, batch_tile=8)  # multi-tile grid, parallel batch axis
    print("KERNEL_OK")
</pallas_src>

<mosaic_0001>
module attributes {stable_mosaic.version = 11 : i64} {
  func.func @kernel(%arg0: i32, %arg1: memref<8x32xf32, #tpu.memory_space<vmem>>, %arg2: memref<8x32xf32, #tpu.memory_space<vmem>>, %arg3: memref<1x32xf32, #tpu.memory_space<vmem>>) attributes {dimension_semantics = [#tpu.dimension_semantics<parallel>], iteration_bounds = array<i64: 1>, scalar_prefetch = 0 : i64, scratch_operands = 0 : i64, tpu.core_type = #tpu.core_type<tc>, window_params = [{transform_indices = @transform_0, window_bounds = array<i64: 8, 32>}, {transform_indices = @transform_1, window_bounds = array<i64: 8, 32>}, {transform_indices = @transform_2, window_bounds = array<i64: 1, 32>}]} {
    %c0 = arith.constant 0 : index
    %c0_0 = arith.constant 0 : index
    %0 = vector.load %arg1[%c0, %c0_0] : memref<8x32xf32, #tpu.memory_space<vmem>>, vector<8x32xf32>
    %cst = arith.constant 0.333333343 : f32
    %1 = vector.broadcast %cst : f32 to vector<8x32xf32>
    %2 = arith.mulf %0, %1 : vector<8x32xf32>
    %c0_1 = arith.constant 0 : index
    %c0_2 = arith.constant 0 : index
    %3 = vector.load %arg2[%c0_1, %c0_2] : memref<8x32xf32, #tpu.memory_space<vmem>>, vector<8x32xf32>
    %cst_3 = arith.constant 0.333333343 : f32
    %4 = vector.broadcast %cst_3 : f32 to vector<8x32xf32>
    %5 = arith.mulf %3, %4 : vector<8x32xf32>
    %cst_4 = arith.constant dense<0xFF800000> : vector<8xf32>
    %6 = vector.multi_reduction <maximumf>, %2, %cst_4 [1] : vector<8x32xf32> to vector<8xf32>
    %7 = vector.shape_cast %6 : vector<8xf32> to vector<8x1xf32>
    %8 = vector.broadcast %7 : vector<8x1xf32> to vector<8x32xf32>
    %9 = arith.subf %2, %8 : vector<8x32xf32>
    %10 = math.exp %9 : vector<8x32xf32>
    %cst_5 = arith.constant dense<0.000000e+00> : vector<8xf32>
    %11 = vector.multi_reduction <add>, %10, %cst_5 [1] : vector<8x32xf32> to vector<8xf32>
    %12 = vector.shape_cast %11 : vector<8xf32> to vector<8x1xf32>
    %13 = math.log %12 : vector<8x1xf32>
    %14 = vector.broadcast %13 : vector<8x1xf32> to vector<8x32xf32>
    %15 = arith.subf %9, %14 : vector<8x32xf32>
    %cst_6 = arith.constant dense<0xFF800000> : vector<8xf32>
    %16 = vector.multi_reduction <maximumf>, %5, %cst_6 [1] : vector<8x32xf32> to vector<8xf32>
    %17 = vector.shape_cast %16 : vector<8xf32> to vector<8x1xf32>
    %18 = vector.broadcast %17 : vector<8x1xf32> to vector<8x32xf32>
    %19 = arith.subf %5, %18 : vector<8x32xf32>
    %20 = math.exp %19 : vector<8x32xf32>
    %cst_7 = arith.constant dense<0.000000e+00> : vector<8xf32>
    %21 = vector.multi_reduction <add>, %20, %cst_7 [1] : vector<8x32xf32> to vector<8xf32>
    %22 = vector.shape_cast %21 : vector<8xf32> to vector<8x1xf32>
    %23 = tpu.reciprocal %22 : vector<8x1xf32> -> vector<8x1xf32>
    %24 = vector.broadcast %23 : vector<8x1xf32> to vector<8x32xf32>
    %25 = arith.mulf %20, %24 : vector<8x32xf32>
    %cst_8 = arith.constant 1.000000e-07 : f32
    %26 = vector.broadcast %cst_8 : f32 to vector<8x32xf32>
    %27 = arith.addf %25, %26 : vector<8x32xf32>
    %28 = math.log %27 : vector<8x32xf32>
    %29 = arith.subf %28, %15 : vector<8x32xf32>
    %30 = arith.mulf %27, %29 : vector<8x32xf32>
    %cst_9 = arith.constant dense<0.000000e+00> : vector<32xf32>
    %31 = vector.multi_reduction <add>, %30, %cst_9 [0] : vector<8x32xf32> to vector<32xf32>
    %32 = vector.shape_cast %31 : vector<32xf32> to vector<1x32xf32>
    %c0_10 = arith.constant 0 : index
    %c0_11 = arith.constant 0 : index
    %33 = vector.load %arg3[%c0_10, %c0_11] : memref<1x32xf32, #tpu.memory_space<vmem>>, vector<1x32xf32>
    tpu.vector_store %arg3[%c0_10, %c0_11], %32 {strides = array<i32>} : memref<1x32xf32, #tpu.memory_space<vmem>>, vector<1x32xf32>,
    return
  }
  func.func @transform_0(%arg0: i32) -> (i32, i32) {
    %c0_i32 = arith.constant 0 : i32
    %c0_i32_0 = arith.constant 0 : i32
    return %arg0, %c0_i32 : i32, i32
  }
  func.func @transform_1(%arg0: i32) -> (i32, i32) {
    %c0_i32 = arith.constant 0 : i32
    %c0_i32_0 = arith.constant 0 : i32
    return %arg0, %c0_i32 : i32, i32
  }
  func.func @transform_2(%arg0: i32) -> (i32, i32) {
    %c0_i32 = arith.constant 0 : i32
    %c0_i32_0 = arith.constant 0 : i32
    return %arg0, %c0_i32 : i32, i32
  }
}

</mosaic_0001>

<llo_original>
// kernel: tpu_custom_call.1
$region0: #{tpu_custom_call.1}
  #allocation0 [shape = 'u32[]', space=smem, size = 0x4, offset = 0x4, fixed_abs, tag = 'smem constant byte address 0x4 - core index']
  #allocation1 [shape = 'u32[144,128]{1,0:T(1,128)}', space=vmem, size = 0x12000, scoped, tag = 'internal scratch']
  %s0 = inlined_call_operand.hbm [shape: f32[8,32], index: 0, kind: input, shape index: {}]
  %s1 = inlined_call_operand.hbm [shape: f32[8,32], index: 1, kind: input, shape index: {}]
  %s2 = inlined_call_operand.hbm [shape: f32[1,32], index: 2, kind: output, shape index: {}]
  %s3 = sld [smem:[#allocation0]]
  $region26: #{tpu_custom_call.1} parent=0
    _
  %s5 = ssub.s32 1, %s3
  %s6 = scalar_select 0, %s5, %s3
  $region1: #{tpu_custom_call.1} parent=0
    #allocation2 [shape = 'u8[4096]{0}', space=vmem, size = 0x1000, scoped, tag = 'input window, operand 0, single buffered']
    #allocation3 [shape = 's32[1]{0}', space=sflag, size = 0x4, scoped, tag = 'scoped memory for tpu_custom_call.1']
    #allocation4 [shape = 's32[1]{0}', space=sflag, size = 0x4, scoped, tag = 'scoped memory for tpu_custom_call.1']
    #allocation5 [shape = 'u8[4096]{0}', space=vmem, size = 0x1000, scoped, tag = 'input window, operand 1, single buffered']
    #allocation6 [shape = 's32[1]{0}', space=sflag, size = 0x4, scoped, tag = 'scoped memory for tpu_custom_call.1']
    #allocation7 [shape = 'u8[512]{0}', space=vmem, size = 0x400, scoped, tag = 'output window, operand 0, single buffered']
    %7 = vsyncpa [#allocation3], 0
    %8 = vsyncpa [#allocation6], 0
    %9 = vsyncpa [#allocation4], 0
    // Predicated region
    $region2: #{tpu_custom_call.1} parent=1 // pred_check
      _
    $region3: #{tpu_custom_call.1} parent=1 // pred_check_branch
      %11 = sbr.rel (0) target = $region5
    $region4: #{tpu_custom_call.1} parent=1 // pred_region
      %s13 = ssub.s32 128, 128
      %14 = vsyncadd [#allocation3], %s13
      %s16 = sshll.u32 [#allocation2], 4
      %s17 = int_to_ptr.vmem [resolvable:$true] %s16
      %19 = dma.hbm_to_vmem [thread:$0]  %s0, 128, %s17, [#allocation3]
    $region5: #{tpu_custom_call.1} parent=1 // pred_fallthru
      _
    // Predicated region
    $region6: #{tpu_custom_call.1} parent=1 // pred_check
      _
    $region7: #{tpu_custom_call.1} parent=1 // pred_check_branch
      %21 = sbr.rel (0) target = $region9
    $region8: #{tpu_custom_call.1} parent=1 // pred_region
      %s23 = ssub.s32 128, 128
      %24 = vsyncadd [#allocation6], %s23
      %s26 = sshll.u32 [#allocation5], 4
      %s27 = int_to_ptr.vmem [resolvable:$true] %s26
      %29 = dma.hbm_to_vmem [thread:$0]  %s1, 128, %s27, [#allocation6]
    $region9: #{tpu_custom_call.1} parent=1 // pred_fallthru
      _
    // Predicated region
    $region10: #{tpu_custom_call.1} parent=1 // pred_check
      _
    $region11: #{tpu_custom_call.1} parent=1 // pred_check_branch
      %31 = sbr.rel (0) target = $region13
    $region12: #{tpu_custom_call.1} parent=1 // pred_region
      %32 = dma.done [#allocation3], 128
    $region13: #{tpu_custom_call.1} parent=1 // pred_fallthru
      _
    // Predicated region
    $region14: #{tpu_custom_call.1} parent=1 // pred_check
      _
    $region15: #{tpu_custom_call.1} parent=1 // pred_check_branch
      %34 = sbr.rel (0) target = $region17
    $region16: #{tpu_custom_call.1} parent=1 // pred_region
      %35 = dma.done [#allocation6], 128
    $region17: #{tpu_custom_call.1} parent=1 // pred_fallthru
      _
    %v36 = vld [vmem:[#allocation2] sm:$0xff]
    %v37 = vmul.f32 %v36, 0.33333334
    %v38 = vld [vmem:[#allocation5] sm:$0xff]
    %v39 = vmul.f32 %v38, 0.33333334
    %vm40 = vcmask 261120
    %v41 = vsel %vm40, %v37, -inf
    %42 = vmax.xlane.f32.xlu0 %v41
    %v43 = vpop.xlane.xlu0 %42
    %v44 = vsub.f32 %v37, %v43
    %v45 = vmul.f32 %v44, 1.442695
    %v46 = vpow.pop %v45
    %v47 = vsel %vm40, %v46, 0.0
    %48 = vadd.xlane.f32.xlu0 %v47
    %v49 = vpop.xlane.xlu0 %48
    %v50 = vlog2.pop %v49
    %v51 = vmul.f32 %v50, 0.6931472
    %v52 = vsub.f32 %v44, %v51
    %v53 = vsel %vm40, %v39, -inf
    %54 = vmax.xlane.f32.xlu0 %v53
    %v55 = vpop.xlane.xlu0 %54
    %v56 = vsub.f32 %v39, %v55
    %v57 = vmul.f32 %v56, 1.442695
    %v58 = vpow.pop %v57
    %v59 = vsel %vm40, %v58, 0.0
    %60 = vadd.xlane.f32.xlu0 %v59
    %v61 = vpop.xlane.xlu0 %60
    %v62 = vrcp.pop %v61
    %v63 = vmul.f32 %v58, %v62
    %v64 = vadd.f32 %v63, 1e-07
    %v65 = vlog2.pop %v64
    %v66 = vmul.f32 %v65, 0.6931472
    %v67 = vsub.f32 %v66, %v52
    %v68 = vmul.f32 %v64, %v67
    %v69 = vsel %vm40, %v68, 0.0
    %v70 = vrot.slane %v69, 4
    %v71 = vadd.f32 %v69, %v70
    %v72 = vrot.slane %v71, 2
    %v73 = vadd.f32 %v71, %v72
    %v74 = vrot.slane %v73, 1
    %v75 = vadd.f32 %v73, %v74
    %vm76 = vcmask 253952
    %77 = vst.msk [vmem:[#allocation7] sm:$0x1] %vm76, %v75
    // Predicated region
    $region18: #{tpu_custom_call.1} parent=1 // pred_check
      _
    $region19: #{tpu_custom_call.1} parent=1 // pred_check_branch
      %79 = sbr.rel (0) target = $region21
    $region20: #{tpu_custom_call.1} parent=1 // pred_region
      %s81 = ssub.s32 16, 16
      %82 = vsyncadd [#allocation4], %s81
      %s84 = sshll.u32 [#allocation7], 4
      %s85 = int_to_ptr.vmem [resolvable:$true] %s84
      %87 = dma.vmem_to_hbm [thread:$0]  %s85, 16, %s2, [#allocation4]
    $region21: #{tpu_custom_call.1} parent=1 // pred_fallthru
      _
    // Predicated region
    $region22: #{tpu_custom_call.1} parent=1 // pred_check
      _
    $region23: #{tpu_custom_call.1} parent=1 // pred_check_branch
      %89 = sbr.rel (0) target = $region25
    $region24: #{tpu_custom_call.1} parent=1 // pred_region
      %90 = dma.done [#allocation4], 16
    $region25: #{tpu_custom_call.1} parent=1 // pred_fallthru
      _
    %91 = vsyncpa [#allocation3], 1
    %92 = vsyncpa [#allocation6], 1
    %93 = vsyncpa [#allocation4], 1

</llo_original>
